<compile_context>
chip_gen: v7x
topology: tpu7x:2x2x1
jax: 0.10.0
libtpu: 0.0.40
codegen_flags: <defaults>
</compile_context>

<pallas_src>
import functools

import jax
import jax.numpy as jnp
from jax import lax
from jax.experimental import pallas as pl
from jax.experimental.pallas import tpu as pltpu


def basic_block_kernel(x_ref, w_ref, b_ref, out_ref, *, H, W):
    """Fused BasicBlock for one batch-group.

    x_ref  : (R, P)      f32, R = NB*C rows (image-major, channel within each
                         image), each row one flattened H*W channel plane.
    w_ref  : (2, R, 9*R) f32, per-conv image-block-diagonal im2col weights
                         with the BN scale folded in.
    b_ref  : (2, R, 1)   f32, per-conv folded BN bias (tiled over images).
    out_ref: (R, P)      sublane/lane-dense output block.
    """
    P = H * W
    R = x_ref.shape[0]
    x = x_ref[...]                                    # (R, P) f32, residual path

    # Per-tap validity masks, computed once and reused by both convs.  Border
    # masking replaces spatial zero-padding: every out-of-image tap (including
    # the cross-row / cross-image wraparound introduced by the lane rolls
    # below, whose offsets are all <= W+1) lands on a masked position.
    lane = lax.broadcasted_iota(jnp.int32, (1, P), 1)
    col = (lane & (W - 1)) if (W & (W - 1)) == 0 else (lane % W)
    v_left = col != 0                 # tap reads column x-1
    v_right = col != (W - 1)          # tap reads column x+1
    v_top = lane >= W                 # tap reads row y-1
    v_bot = lane < (H - 1) * W        # tap reads row y+1

    taps_meta = []                    # (flattened lane offset, mask-or-None)
    for dy in range(3):
        for dx in range(3):
            m = None
            if dy == 0:
                m = v_top
            elif dy == 2:
                m = v_bot
            if dx == 0:
                m = v_left if m is None else (m & v_left)
            elif dx == 2:
                m = v_right if m is None else (m & v_right)
            if m is not None:
                m = jnp.broadcast_to(m, (R, P))       # hoisted once, reused 2x
            taps_meta.append(((dy - 1) * W + (dx - 1), m))

    def conv3x3(act, w):
        # act: (R, P) f32 activation (in vregs), w: (R, 9R) f32 im2col weight.
        # Taps are generated with XLU lane rolls (no VMEM scratch, no
        # unaligned slices) and consumed by a single MXU dot.
        taps = []
        for off, m in taps_meta:
            t = act if off == 0 else pltpu.roll(act, (-off) % P, 1)
            if m is not None:
                t = jnp.where(m, t, 0.0)
            taps.append(t)
        tap_mat = jnp.concatenate(taps, axis=0)       # (9R, P), tile-aligned
        return jnp.dot(w, tap_mat, preferred_element_type=jnp.float32)

    # conv1 -> bn1 (folded) -> relu     (intermediate stays in vregs)
    y = jnp.maximum(conv3x3(x, w_ref[0]) + b_ref[0], 0.0)
    # conv2 -> bn2 (folded) -> + identity -> relu
    y = conv3x3(y, w_ref[1]) + b_ref[1] + x
    out_ref[...] = jnp.maximum(y, 0.0).astype(out_ref.dtype)


def basic_block_forward(x_nchw, w1, g1, be1, m1, v1, w2, g2, be2, m2, v2,
                        eps=1e-5):
    """x_nchw: (N, C, H, W). Conv weights w1, w2: (3, 3, C, C) in HWIO layout."""
    N, Cin, H, W = x_nchw.shape
    C = w1.shape[-1]
    assert Cin == C, "BasicBlock with downsample=None requires inplanes == planes"
    P = H * W

    # Images per block: pack enough images so the row count fills the 8 f32
    # sublanes (dense vregs / unmasked stores) when C is tiny.  At real ResNet
    # C (>= 8) this degenerates to NB=1 and the plain (C, 9C) im2col weight.
    if C >= 8:
        NB = 1
    else:
        NB = max(1, 8 // C)
        while NB > 1 and N % NB != 0:
            NB -= 1
    R = NB * C
    G = N // NB                       # grid steps (1 at these toy shapes)

    # Fold inference BN:  y = z*s + (beta - mean*s),  s = gamma / sqrt(var+eps)
    s1 = (g1 / jnp.sqrt(v1 + eps)).astype(jnp.float32)
    s2 = (g2 / jnp.sqrt(v2 + eps)).astype(jnp.float32)
    bias1 = (be1 - m1 * s1).astype(jnp.float32)
    bias2 = (be2 - m2 * s2).astype(jnp.float32)

    def pack_w(w, s):
        # HWIO (3,3,Cin,Cout) * scale[co] -> tap-major (9, Cout, Cin), then the
        # image-block-diagonal im2col layout (NB*C, 9*NB*C) used by the kernel.
        w = w.astype(jnp.float32) * s[None, None, None, :]
        w9 = jnp.transpose(w.reshape(9, C, C), (0, 2, 1))     # (9, Cout, Cin)
        eye = jnp.eye(NB, dtype=jnp.float32)
        blocks = [jnp.kron(eye, w9[t]) for t in range(9)]      # each (R, R)
        return jnp.concatenate(blocks, axis=1)                 # (R, 9R)

    w_both = jnp.stack([pack_w(w1, s1), pack_w(w2, s2)])        # (2, R, 9R)
    b_both = jnp.stack([jnp.tile(bias1, NB), jnp.tile(bias2, NB)])
    b_both = b_both.reshape(2, R, 1)                            # (2, R, 1)

    # NCHW -> (N*C, P) is a free, contiguous reshape (no transpose, no pad).
    x_flat = x_nchw.reshape(N * C, P)

    out_flat = pl.pallas_call(
        functools.partial(basic_block_kernel, H=H, W=W),
        out_shape=jax.ShapeDtypeStruct((N * C, P), x_nchw.dtype),
        grid_spec=pltpu.PrefetchScalarGridSpec(
            num_scalar_prefetch=0,
            grid=(G,),
            in_specs=[
                pl.BlockSpec((R, P), lambda g: (g, 0)),
                pl.BlockSpec((2, R, 9 * R), lambda g: (0, 0, 0)),  # resident
                pl.BlockSpec((2, R, 1), lambda g: (0, 0, 0)),      # resident
            ],
            out_specs=pl.BlockSpec((R, P), lambda g: (g, 0)),
        ),
        compiler_params=pltpu.CompilerParams(
            dimension_semantics=("parallel",)),
    )(x_flat, w_both, b_both)

    return out_flat.reshape(N, C, H, W)


def _reference_forward(x_nchw, w1, g1, be1, m1, v1, w2, g2, be2, m2, v2,
                       eps=1e-5):
    """Pure-JAX reference (lax.conv, NHWC internally, f32) for verification."""
    x = jnp.transpose(x_nchw, (0, 2, 3, 1)).astype(jnp.float32)
    dn = ('NHWC', 'HWIO', 'NHWC')

    def bn(y, g, b, m, v):
        return (y - m) / jnp.sqrt(v + eps) * g + b

    y = lax.conv_general_dilated(x, w1.astype(jnp.float32), (1, 1), 'SAME',
                                 dimension_numbers=dn)
    y = jnp.maximum(bn(y, g1, be1, m1, v1), 0.0)
    y = lax.conv_general_dilated(y, w2.astype(jnp.float32), (1, 1), 'SAME',
                                 dimension_numbers=dn)
    y = bn(y, g2, be2, m2, v2) + x
    y = jnp.maximum(y, 0.0)
    return jnp.transpose(y, (0, 3, 1, 2))


if __name__ == "__main__":
    # BasicBlock(inplanes=4, planes=4, stride=1, downsample=None)
    N, C, H, W = 2, 4, 16, 16

    key = jax.random.PRNGKey(0)
    kx, kw1, kw2, kg1, kb1, kg2, kb2 = jax.random.split(key, 7)

    x = jax.random.normal(kx, (N, C, H, W), dtype=jnp.float32)

    # conv weights in HWIO layout, deterministic init
    w1 = jax.random.normal(kw1, (3, 3, C, C), dtype=jnp.float32) * 0.1
    w2 = jax.random.normal(kw2, (3, 3, C, C), dtype=jnp.float32) * 0.1

    # BatchNorm params (affine + running stats, deterministic)
    g1 = 1.0 + 0.1 * jax.random.normal(kg1, (C,), dtype=jnp.float32)
    be1 = 0.1 * jax.random.normal(kb1, (C,), dtype=jnp.float32)
    m1 = jnp.zeros((C,), jnp.float32)
    v1 = jnp.ones((C,), jnp.float32)
    g2 = 1.0 + 0.1 * jax.random.normal(kg2, (C,), dtype=jnp.float32)
    be2 = 0.1 * jax.random.normal(kb2, (C,), dtype=jnp.float32)
    m2 = jnp.zeros((C,), jnp.float32)
    v2 = jnp.ones((C,), jnp.float32)

    out = basic_block_forward(x, w1, g1, be1, m1, v1, w2, g2, be2, m2, v2)
    out = jax.block_until_ready(out)

    ref = _reference_forward(x, w1, g1, be1, m1, v1, w2, g2, be2, m2, v2)
    assert out.shape == (N, C, H, W)
    # All-f32 in-kernel path; tolerance leaves headroom for the MXU's default
    # matmul precision.  Typical max error is far below this.
    assert jnp.allclose(out, ref, atol=2e-2, rtol=2e-2), "mismatch vs reference"

    print("KERNEL_OK")
</pallas_src>

<mosaic_0001>
module attributes {stable_mosaic.version = 11 : i64} {
  func.func @basic_block_kernel(%arg0: i32, %arg1: memref<8x256xf32, #tpu.memory_space<vmem>>, %arg2: memref<2x8x72xf32, #tpu.memory_space<vmem>>, %arg3: memref<2x8x1xf32, #tpu.memory_space<vmem>>, %arg4: memref<8x256xf32, #tpu.memory_space<vmem>>) attributes {dimension_semantics = [#tpu.dimension_semantics<parallel>], iteration_bounds = array<i64: 1>, scalar_prefetch = 0 : i64, scratch_operands = 0 : i64, tpu.core_type = #tpu.core_type<tc>, window_params = [{transform_indices = @transform_0, window_bounds = array<i64: 8, 256>}, {pipeline_mode = #tpu.pipeline_mode<synchronous>, transform_indices = @transform_1, window_bounds = array<i64: 2, 8, 72>}, {pipeline_mode = #tpu.pipeline_mode<synchronous>, transform_indices = @transform_2, window_bounds = array<i64: 2, 8, 1>}, {transform_indices = @transform_3, window_bounds = array<i64: 8, 256>}]} {
    %c0 = arith.constant 0 : index
    %c0_0 = arith.constant 0 : index
    %0 = vector.load %arg1[%c0, %c0_0] : memref<8x256xf32, #tpu.memory_space<vmem>>, vector<8x256xf32>
    %1 = tpu.iota {dimensions = array<i32: 1>} : vector<1x256xi32>
    %c15_i32 = arith.constant 15 : i32
    %2 = vector.broadcast %c15_i32 : i32 to vector<1x256xi32>
    %3 = arith.andi %1, %2 : vector<1x256xi32>
    %c0_i32 = arith.constant 0 : i32
    %4 = vector.broadcast %c0_i32 : i32 to vector<1x256xi32>
    %5 = arith.cmpi ne, %3, %4 : vector<1x256xi32>
    %c15_i32_1 = arith.constant 15 : i32
    %6 = vector.broadcast %c15_i32_1 : i32 to vector<1x256xi32>
    %7 = arith.cmpi ne, %3, %6 : vector<1x256xi32>
    %c16_i32 = arith.constant 16 : i32
    %8 = vector.broadcast %c16_i32 : i32 to vector<1x256xi32>
    %9 = arith.cmpi sge, %1, %8 : vector<1x256xi32>
    %c240_i32 = arith.constant 240 : i32
    %10 = vector.broadcast %c240_i32 : i32 to vector<1x256xi32>
    %11 = arith.cmpi slt, %1, %10 : vector<1x256xi32>
    %12 = arith.andi %9, %5 : vector<1x256xi1>
    %13 = vector.shape_cast %12 : vector<1x256xi1> to vector<1x256xi1>
    %14 = vector.broadcast %13 : vector<1x256xi1> to vector<8x256xi1>
    %15 = vector.shape_cast %9 : vector<1x256xi1> to vector<1x256xi1>
    %16 = vector.broadcast %15 : vector<1x256xi1> to vector<8x256xi1>
    %17 = arith.andi %9, %7 : vector<1x256xi1>
    %18 = vector.shape_cast %17 : vector<1x256xi1> to vector<1x256xi1>
    %19 = vector.broadcast %18 : vector<1x256xi1> to vector<8x256xi1>
    %20 = vector.shape_cast %5 : vector<1x256xi1> to vector<1x256xi1>
    %21 = vector.broadcast %20 : vector<1x256xi1> to vector<8x256xi1>
    %22 = vector.shape_cast %7 : vector<1x256xi1> to vector<1x256xi1>
    %23 = vector.broadcast %22 : vector<1x256xi1> to vector<8x256xi1>
    %24 = arith.andi %11, %5 : vector<1x256xi1>
    %25 = vector.shape_cast %24 : vector<1x256xi1> to vector<1x256xi1>
    %26 = vector.broadcast %25 : vector<1x256xi1> to vector<8x256xi1>
    %27 = vector.shape_cast %11 : vector<1x256xi1> to vector<1x256xi1>
    %28 = vector.broadcast %27 : vector<1x256xi1> to vector<8x256xi1>
    %29 = arith.andi %11, %7 : vector<1x256xi1>
    %30 = vector.shape_cast %29 : vector<1x256xi1> to vector<1x256xi1>
    %31 = vector.broadcast %30 : vector<1x256xi1> to vector<8x256xi1>
    %c0_2 = arith.constant 0 : index
    %c0_3 = arith.constant 0 : index
    %c0_4 = arith.constant 0 : index
    %32 = vector.load %arg2[%c0_2, %c0_3, %c0_4] : memref<2x8x72xf32, #tpu.memory_space<vmem>>, vector<1x8x72xf32>
    %33 = vector.shape_cast %32 : vector<1x8x72xf32> to vector<8x72xf32>
    %c17_i32 = arith.constant 17 : i32
    %34 = tpu.dynamic_rotate %0 by %c17_i32 dim 1 : vector<8x256xf32>, i32 -> vector<8x256xf32>
    %cst = arith.constant 0.000000e+00 : f32
    %35 = vector.broadcast %cst : f32 to vector<8x256xf32>
    %36 = arith.select %14, %34, %35 : vector<8x256xi1>, vector<8x256xf32>
    %c16_i32_5 = arith.constant 16 : i32
    %37 = tpu.dynamic_rotate %0 by %c16_i32_5 dim 1 : vector<8x256xf32>, i32 -> vector<8x256xf32>
    %cst_6 = arith.constant 0.000000e+00 : f32
    %38 = vector.broadcast %cst_6 : f32 to vector<8x256xf32>
    %39 = arith.select %16, %37, %38 : vector<8x256xi1>, vector<8x256xf32>
    %c15_i32_7 = arith.constant 15 : i32
    %40 = tpu.dynamic_rotate %0 by %c15_i32_7 dim 1 : vector<8x256xf32>, i32 -> vector<8x256xf32>
    %cst_8 = arith.constant 0.000000e+00 : f32
    %41 = vector.broadcast %cst_8 : f32 to vector<8x256xf32>
    %42 = arith.select %19, %40, %41 : vector<8x256xi1>, vector<8x256xf32>
    %c1_i32 = arith.constant 1 : i32
    %43 = tpu.dynamic_rotate %0 by %c1_i32 dim 1 : vector<8x256xf32>, i32 -> vector<8x256xf32>
    %cst_9 = arith.constant 0.000000e+00 : f32
    %44 = vector.broadcast %cst_9 : f32 to vector<8x256xf32>
    %45 = arith.select %21, %43, %44 : vector<8x256xi1>, vector<8x256xf32>
    %c255_i32 = arith.constant 255 : i32
    %46 = tpu.dynamic_rotate %0 by %c255_i32 dim 1 : vector<8x256xf32>, i32 -> vector<8x256xf32>
    %cst_10 = arith.constant 0.000000e+00 : f32
    %47 = vector.broadcast %cst_10 : f32 to vector<8x256xf32>
    %48 = arith.select %23, %46, %47 : vector<8x256xi1>, vector<8x256xf32>
    %c241_i32 = arith.constant 241 : i32
    %49 = tpu.dynamic_rotate %0 by %c241_i32 dim 1 : vector<8x256xf32>, i32 -> vector<8x256xf32>
    %cst_11 = arith.constant 0.000000e+00 : f32
    %50 = vector.broadcast %cst_11 : f32 to vector<8x256xf32>
    %51 = arith.select %26, %49, %50 : vector<8x256xi1>, vector<8x256xf32>
    %c240_i32_12 = arith.constant 240 : i32
    %52 = tpu.dynamic_rotate %0 by %c240_i32_12 dim 1 : vector<8x256xf32>, i32 -> vector<8x256xf32>
    %cst_13 = arith.constant 0.000000e+00 : f32
    %53 = vector.broadcast %cst_13 : f32 to vector<8x256xf32>
    %54 = arith.select %28, %52, %53 : vector<8x256xi1>, vector<8x256xf32>
    %c239_i32 = arith.constant 239 : i32
    %55 = tpu.dynamic_rotate %0 by %c239_i32 dim 1 : vector<8x256xf32>, i32 -> vector<8x256xf32>
    %cst_14 = arith.constant 0.000000e+00 : f32
    %56 = vector.broadcast %cst_14 : f32 to vector<8x256xf32>
    %57 = arith.select %31, %55, %56 : vector<8x256xi1>, vector<8x256xf32>
    %58 = tpu.concatenate %36, %39, %42, %45, %0, %48, %51, %54, %57 in 0 : vector<8x256xf32>, vector<8x256xf32>, vector<8x256xf32>, vector<8x256xf32>, vector<8x256xf32>, vector<8x256xf32>, vector<8x256xf32>, vector<8x256xf32>, vector<8x256xf32> -> vector<72x256xf32>
    %cst_15 = arith.constant dense<0.000000e+00> : vector<8x256xf32>
    %59 = tpu.matmul %33, %58, %cst_15 {dimension_numbers = #tpu.dot_dimension_numbers<[1], [0], [0], [1], [0, 0, 1, 1], [], []>} : vector<8x72xf32>, vector<72x256xf32>, vector<8x256xf32> -> vector<8x256xf32>
    %c0_16 = arith.constant 0 : index
    %c0_17 = arith.constant 0 : index
    %c0_18 = arith.constant 0 : index
    %60 = vector.load %arg3[%c0_16, %c0_17, %c0_18] : memref<2x8x1xf32, #tpu.memory_space<vmem>>, vector<1x8x1xf32>
    %61 = vector.shape_cast %60 : vector<1x8x1xf32> to vector<8x1xf32>
    %62 = vector.broadcast %61 : vector<8x1xf32> to vector<8x256xf32>
    %63 = arith.addf %59, %62 : vector<8x256xf32>
    %cst_19 = arith.constant 0.000000e+00 : f32
    %64 = vector.broadcast %cst_19 : f32 to vector<8x256xf32>
    %65 = arith.maximumf %63, %64 : vector<8x256xf32>
    %c1 = arith.constant 1 : index
    %c0_20 = arith.constant 0 : index
    %c0_21 = arith.constant 0 : index
    %66 = vector.load %arg2[%c1, %c0_20, %c0_21] : memref<2x8x72xf32, #tpu.memory_space<vmem>>, vector<1x8x72xf32>
    %67 = vector.shape_cast %66 : vector<1x8x72xf32> to vector<8x72xf32>
    %c17_i32_22 = arith.constant 17 : i32
    %68 = tpu.dynamic_rotate %65 by %c17_i32_22 dim 1 : vector<8x256xf32>, i32 -> vector<8x256xf32>
    %cst_23 = arith.constant 0.000000e+00 : f32
    %69 = vector.broadcast %cst_23 : f32 to vector<8x256xf32>
    %70 = arith.select %14, %68, %69 : vector<8x256xi1>, vector<8x256xf32>
    %c16_i32_24 = arith.constant 16 : i32
    %71 = tpu.dynamic_rotate %65 by %c16_i32_24 dim 1 : vector<8x256xf32>, i32 -> vector<8x256xf32>
    %cst_25 = arith.constant 0.000000e+00 : f32
    %72 = vector.broadcast %cst_25 : f32 to vector<8x256xf32>
    %73 = arith.select %16, %71, %72 : vector<8x256xi1>, vector<8x256xf32>
    %c15_i32_26 = arith.constant 15 : i32
    %74 = tpu.dynamic_rotate %65 by %c15_i32_26 dim 1 : vector<8x256xf32>, i32 -> vector<8x256xf32>
    %cst_27 = arith.constant 0.000000e+00 : f32
    %75 = vector.broadcast %cst_27 : f32 to vector<8x256xf32>
    %76 = arith.select %19, %74, %75 : vector<8x256xi1>, vector<8x256xf32>
    %c1_i32_28 = arith.constant 1 : i32
    %77 = tpu.dynamic_rotate %65 by %c1_i32_28 dim 1 : vector<8x256xf32>, i32 -> vector<8x256xf32>
    %cst_29 = arith.constant 0.000000e+00 : f32
    %78 = vector.broadcast %cst_29 : f32 to vector<8x256xf32>
    %79 = arith.select %21, %77, %78 : vector<8x256xi1>, vector<8x256xf32>
    %c255_i32_30 = arith.constant 255 : i32
    %80 = tpu.dynamic_rotate %65 by %c255_i32_30 dim 1 : vector<8x256xf32>, i32 -> vector<8x256xf32>
    %cst_31 = arith.constant 0.000000e+00 : f32
    %81 = vector.broadcast %cst_31 : f32 to vector<8x256xf32>
    %82 = arith.select %23, %80, %81 : vector<8x256xi1>, vector<8x256xf32>
    %c241_i32_32 = arith.constant 241 : i32
    %83 = tpu.dynamic_rotate %65 by %c241_i32_32 dim 1 : vector<8x256xf32>, i32 -> vector<8x256xf32>
    %cst_33 = arith.constant 0.000000e+00 : f32
    %84 = vector.broadcast %cst_33 : f32 to vector<8x256xf32>
    %85 = arith.select %26, %83, %84 : vector<8x256xi1>, vector<8x256xf32>
    %c240_i32_34 = arith.constant 240 : i32
    %86 = tpu.dynamic_rotate %65 by %c240_i32_34 dim 1 : vector<8x256xf32>, i32 -> vector<8x256xf32>
    %cst_35 = arith.constant 0.000000e+00 : f32
    %87 = vector.broadcast %cst_35 : f32 to vector<8x256xf32>
    %88 = arith.select %28, %86, %87 : vector<8x256xi1>, vector<8x256xf32>
    %c239_i32_36 = arith.constant 239 : i32
    %89 = tpu.dynamic_rotate %65 by %c239_i32_36 dim 1 : vector<8x256xf32>, i32 -> vector<8x256xf32>
    %cst_37 = arith.constant 0.000000e+00 : f32
    %90 = vector.broadcast %cst_37 : f32 to vector<8x256xf32>
    %91 = arith.select %31, %89, %90 : vector<8x256xi1>, vector<8x256xf32>
    %92 = tpu.concatenate %70, %73, %76, %79, %65, %82, %85, %88, %91 in 0 : vector<8x256xf32>, vector<8x256xf32>, vector<8x256xf32>, vector<8x256xf32>, vector<8x256xf32>, vector<8x256xf32>, vector<8x256xf32>, vector<8x256xf32>, vector<8x256xf32> -> vector<72x256xf32>
    %cst_38 = arith.constant dense<0.000000e+00> : vector<8x256xf32>
    %93 = tpu.matmul %67, %92, %cst_38 {dimension_numbers = #tpu.dot_dimension_numbers<[1], [0], [0], [1], [0, 0, 1, 1], [], []>} : vector<8x72xf32>, vector<72x256xf32>, vector<8x256xf32> -> vector<8x256xf32>
    %c1_39 = arith.constant 1 : index
    %c0_40 = arith.constant 0 : index
    %c0_41 = arith.constant 0 : index
    %94 = vector.load %arg3[%c1_39, %c0_40, %c0_41] : memref<2x8x1xf32, #tpu.memory_space<vmem>>, vector<1x8x1xf32>
    %95 = vector.shape_cast %94 : vector<1x8x1xf32> to vector<8x1xf32>
    %96 = vector.broadcast %95 : vector<8x1xf32> to vector<8x256xf32>
    %97 = arith.addf %93, %96 : vector<8x256xf32>
    %98 = arith.addf %97, %0 : vector<8x256xf32>
    %cst_42 = arith.constant 0.000000e+00 : f32
    %99 = vector.broadcast %cst_42 : f32 to vector<8x256xf32>
    %100 = arith.maximumf %98, %99 : vector<8x256xf32>
    %c0_43 = arith.constant 0 : index
    %c0_44 = arith.constant 0 : index
    %101 = vector.load %arg4[%c0_43, %c0_44] : memref<8x256xf32, #tpu.memory_space<vmem>>, vector<8x256xf32>
    tpu.vector_store %arg4[%c0_43, %c0_44], %100 {strides = array<i32>} : memref<8x256xf32, #tpu.memory_space<vmem>>, vector<8x256xf32>,
    return
  }
  func.func @transform_0(%arg0: i32) -> (i32, i32) {
    %c0_i32 = arith.constant 0 : i32
    %c0_i32_0 = arith.constant 0 : i32
    return %arg0, %c0_i32 : i32, i32
  }
  func.func @transform_1(%arg0: i32) -> (i32, i32, i32) {
    %c0_i32 = arith.constant 0 : i32
    %c0_i32_0 = arith.constant 0 : i32
    %c0_i32_1 = arith.constant 0 : i32
    %c0_i32_2 = arith.constant 0 : i32
    return %c0_i32, %c0_i32_0, %c0_i32_1 : i32, i32, i32
  }
  func.func @transform_2(%arg0: i32) -> (i32, i32, i32) {
    %c0_i32 = arith.constant 0 : i32
    %c0_i32_0 = arith.constant 0 : i32
    %c0_i32_1 = arith.constant 0 : i32
    %c0_i32_2 = arith.constant 0 : i32
    return %c0_i32, %c0_i32_0, %c0_i32_1 : i32, i32, i32
  }
  func.func @transform_3(%arg0: i32) -> (i32, i32) {
    %c0_i32 = arith.constant 0 : i32
    %c0_i32_0 = arith.constant 0 : i32
    return %arg0, %c0_i32 : i32, i32
  }
}

</mosaic_0001>

<llo_original>
// kernel: tpu_custom_call.1
$region0: #{tpu_custom_call.1}
  #allocation0 [shape = 'u32[]', space=smem, size = 0x4, offset = 0x4, fixed_abs, tag = 'smem constant byte address 0x4 - core index']
  #allocation1 [shape = 'u32[144,128]{1,0:T(1,128)}', space=vmem, size = 0x12000, scoped, tag = 'internal scratch']
  %s0 = inlined_call_operand.vmem [shape: f32[8,256], index: 0, kind: input, shape index: {}]
  %s1 = inlined_call_operand.hbm [shape: f32[2,8,72], index: 1, kind: input, shape index: {}]
  %s2 = inlined_call_operand.vmem [shape: f32[2,8,1], index: 2, kind: input, shape index: {}]
  %s3 = inlined_call_operand.hbm [shape: f32[8,256], index: 3, kind: output, shape index: {}]
  %s4 = sld [smem:[#allocation0]]
  $region26: #{tpu_custom_call.1} parent=0
    _
  %s6 = ssub.s32 1, %s4
  %s7 = scalar_select 0, %s6, %s4
  $region1: #{tpu_custom_call.1} parent=0
    #allocation2 [shape = 'u8[8192]{0}', space=vmem, size = 0x2000, scoped, tag = 'input window, operand 1, single buffered']
    #allocation3 [shape = 's32[1]{0}', space=sflag, size = 0x4, scoped, tag = 'scoped memory for tpu_custom_call.1']
    #allocation4 [shape = 's32[1]{0}', space=sflag, size = 0x4, scoped, tag = 'scoped memory for tpu_custom_call.1']
    #allocation5 [shape = 'u8[8192]{0}', space=vmem, size = 0x2000, scoped, tag = 'output window, operand 0, single buffered']
    %8 = vsyncpa [#allocation3], 0
    %9 = vsyncpa [#allocation4], 0
    // Predicated region
    $region2: #{tpu_custom_call.1} parent=1 // pred_check
      _
    $region3: #{tpu_custom_call.1} parent=1 // pred_check_branch
      %11 = sbr.rel (0) target = $region5
    $region4: #{tpu_custom_call.1} parent=1 // pred_region
      _
    $region5: #{tpu_custom_call.1} parent=1 // pred_fallthru
      _
    // Predicated region
    $region6: #{tpu_custom_call.1} parent=1 // pred_check
      _
    $region7: #{tpu_custom_call.1} parent=1 // pred_check_branch
      %13 = sbr.rel (0) target = $region9
    $region8: #{tpu_custom_call.1} parent=1 // pred_region
      %s15 = ssub.s32 256, 256
      %16 = vsyncadd [#allocation3], %s15
      %s17 = sshll.u32 [#allocation2], 4
      %s18 = int_to_ptr.vmem [resolvable:$true] %s17
      %23 = dma.hbm_to_vmem [thread:$0]  %s1, 256, %s18, [#allocation3], 128, 128, 8
    $region9: #{tpu_custom_call.1} parent=1 // pred_fallthru
      _
    // Predicated region
    $region10: #{tpu_custom_call.1} parent=1 // pred_check
      _
    $region11: #{tpu_custom_call.1} parent=1 // pred_check_branch
      %25 = sbr.rel (0) target = $region13
    $region12: #{tpu_custom_call.1} parent=1 // pred_region
      _
    $region13: #{tpu_custom_call.1} parent=1 // pred_fallthru
      _
    // Predicated region
    $region14: #{tpu_custom_call.1} parent=1 // pred_check
      _
    $region15: #{tpu_custom_call.1} parent=1 // pred_check_branch
      %27 = sbr.rel (0) target = $region17
    $region16: #{tpu_custom_call.1} parent=1 // pred_region
      %28 = dma.done [#allocation3], 256
    $region17: #{tpu_custom_call.1} parent=1 // pred_fallthru
      _
    %v29 = vld [vmem:[%s0] sm:$0xff]
    %v30 = vld [vmem:[%s0 + $0x8] sm:$0xff]
    %v31 = vlaneseq
    %v32 = vand.u32 %v31, 127
    %v33 = vadd.s32 %v32, 128
    %v34 = vand.u32 %v32, 15
    %v35 = vand.u32 %v33, 15
    %vm36 = vcmp.ne.s32.totalorder %v34, 0
    %vm37 = vcmp.ne.s32.totalorder %v35, 0
    %vm38 = vcmp.ne.s32.totalorder %v34, 15
    %vm39 = vcmp.ne.s32.totalorder %v35, 15
    %vm40 = vcmp.ge.s32.totalorder %v32, 16
    %vm41 = vcmp.ge.s32.totalorder %v33, 16
    %vm42 = vcmp.lt.s32.totalorder %v32, 240
    %vm43 = vcmp.lt.s32.totalorder %v33, 240
    %vm44 = vmand %vm40, %vm36
    %vm45 = vmand %vm41, %vm37
    %v46 = vsel %vm44, 1, 0
    %v47 = vsel %vm45, 1, 0
    %vm48 = vcmp.eq.s32.totalorder %v46, 1
    %vm49 = vcmp.eq.s32.totalorder %v47, 1
    %v50 = vsel %vm40, 1, 0
    %v51 = vsel %vm41, 1, 0
    %vm52 = vcmp.eq.s32.totalorder %v50, 1
    %vm53 = vcmp.eq.s32.totalorder %v51, 1
    %vm54 = vmand %vm40, %vm38
    %vm55 = vmand %vm41, %vm39
    %v56 = vsel %vm54, 1, 0
    %v57 = vsel %vm55, 1, 0
    %vm58 = vcmp.eq.s32.totalorder %v56, 1
    %vm59 = vcmp.eq.s32.totalorder %v57, 1
    %v60 = vsel %vm36, 1, 0
    %v61 = vsel %vm37, 1, 0
    %vm62 = vcmp.eq.s32.totalorder %v60, 1
    %vm63 = vcmp.eq.s32.totalorder %v61, 1
    %v64 = vsel %vm38, 1, 0
    %v65 = vsel %vm39, 1, 0
    %vm66 = vcmp.eq.s32.totalorder %v64, 1
    %vm67 = vcmp.eq.s32.totalorder %v65, 1
    %vm68 = vmand %vm42, %vm36
    %vm69 = vmand %vm43, %vm37
    %v70 = vsel %vm68, 1, 0
    %v71 = vsel %vm69, 1, 0
    %vm72 = vcmp.eq.s32.totalorder %v70, 1
    %vm73 = vcmp.eq.s32.totalorder %v71, 1
    %v74 = vsel %vm42, 1, 0
    %v75 = vsel %vm43, 1, 0
    %vm76 = vcmp.eq.s32.totalorder %v74, 1
    %vm77 = vcmp.eq.s32.totalorder %v75, 1
    %vm78 = vmand %vm42, %vm38
    %vm79 = vmand %vm43, %vm39
    %v80 = vsel %vm78, 1, 0
    %v81 = vsel %vm79, 1, 0
    %vm82 = vcmp.eq.s32.totalorder %v80, 1
    %vm83 = vcmp.eq.s32.totalorder %v81, 1
    %v84 = vld [vmem:[#allocation2] sm:$0xff]
    %85 = vrot.lane.b32.xlu0 %v29, 17
    %v86 = vpop.permute.xlu0 %85
    %87 = vrot.lane.b32.xlu0 %v30, 17
    %v88 = vpop.permute.xlu0 %87
    %vm89 = vcmp.lt.s32.totalorder %v32, 17
    %v90 = vsel %vm89, %v86, %v88
    %v91 = vsel %vm89, %v88, %v86
    %v92 = vsel %vm48, %v91, 0.0
    %v93 = vsel %vm49, %v90, 0.0
    %94 = vrot.lane.b32.xlu0 %v29, 16
    %v95 = vpop.permute.xlu0 %94
    %96 = vrot.lane.b32.xlu0 %v30, 16
    %v97 = vpop.permute.xlu0 %96
    %vm98 = vcmp.lt.s32.totalorder %v32, 16
    %v99 = vsel %vm98, %v95, %v97
    %v100 = vsel %vm98, %v97, %v95
    %v101 = vsel %vm52, %v100, 0.0
    %v102 = vsel %vm53, %v99, 0.0
    %103 = vrot.lane.b32.xlu0 %v29, 15
    %v104 = vpop.permute.xlu0 %103
    %105 = vrot.lane.b32.xlu0 %v30, 15
    %v106 = vpop.permute.xlu0 %105
    %vm107 = vcmp.lt.s32.totalorder %v32, 15
    %v108 = vsel %vm107, %v104, %v106
    %v109 = vsel %vm107, %v106, %v104
    %v110 = vsel %vm58, %v109, 0.0
    %v111 = vsel %vm59, %v108, 0.0
    %112 = vrot.lane.b32.xlu0 %v29, 1
    %v113 = vpop.permute.xlu0 %112
    %114 = vrot.lane.b32.xlu0 %v30, 1
    %v115 = vpop.permute.xlu0 %114
    %vm116 = vcmp.lt.s32.totalorder %v32, 1
    %v117 = vsel %vm116, %v113, %v115
    %v118 = vsel %vm116, %v115, %v113
    %v119 = vsel %vm62, %v118, 0.0
    %v120 = vsel %vm63, %v117, 0.0
    %121 = vrot.lane.b32.xlu0 %v29, 127
    %v122 = vpop.permute.xlu0 %121
    %123 = vrot.lane.b32.xlu0 %v30, 127
    %v124 = vpop.permute.xlu0 %123
    %vm125 = vcmp.lt.s32.totalorder %v32, 127
    %v126 = vsel %vm125, %v122, %v124
    %v127 = vsel %vm125, %v124, %v122
    %v128 = vsel %vm66, %v126, 0.0
    %v129 = vsel %vm67, %v127, 0.0
    %130 = vrot.lane.b32.xlu0 %v29, 113
    %v131 = vpop.permute.xlu0 %130
    %132 = vrot.lane.b32.xlu0 %v30, 113
    %v133 = vpop.permute.xlu0 %132
    %vm134 = vcmp.lt.s32.totalorder %v32, 113
    %v135 = vsel %vm134, %v131, %v133
    %v136 = vsel %vm134, %v133, %v131
    %v137 = vsel %vm72, %v135, 0.0
    %v138 = vsel %vm73, %v136, 0.0
    %139 = vrot.lane.b32.xlu0 %v29, 112
    %v140 = vpop.permute.xlu0 %139
    %141 = vrot.lane.b32.xlu0 %v30, 112
    %v142 = vpop.permute.xlu0 %141
    %vm143 = vcmp.lt.s32.totalorder %v32, 112
    %v144 = vsel %vm143, %v140, %v142
    %v145 = vsel %vm143, %v142, %v140
    %v146 = vsel %vm76, %v144, 0.0
    %v147 = vsel %vm77, %v145, 0.0
    %148 = vrot.lane.b32.xlu0 %v29, 111
    %v149 = vpop.permute.xlu0 %148
    %150 = vrot.lane.b32.xlu0 %v30, 111
    %v151 = vpop.permute.xlu0 %150
    %vm152 = vcmp.lt.s32.totalorder %v32, 111
    %v153 = vsel %vm152, %v149, %v151
    %v154 = vsel %vm152, %v151, %v149
    %v155 = vsel %vm82, %v153, 0.0
    %v156 = vsel %vm83, %v154, 0.0
    %v157 = vld [vmem:[%s2] sm:$0xff]
    %159 = vset.pattern.permute.xlu0 0
    %160 = vperm.xlu0 %159, %v157
    %v161 = vpop.permute.xlu0 %160
    %vm163 = vcmask 588800
    %v165 = vsel %vm163, %v84, 0
    %167 = vmatprep.subr.mxu0 %v93
    %168 = vmatpush1.msra.mxu0 %v92
    %169 = vmatprep.subr.mxu0 %v102
    %170 = vmatpush1.msra.mxu0 %v101
    %171 = vmatprep.subr.mxu0 %v111
    %172 = vmatpush1.msra.mxu0 %v110
    %173 = vmatprep.subr.mxu0 %v120
    %174 = vmatpush1.msra.mxu0 %v119
    %175 = vmatprep.subr.mxu0 %v30
    %176 = vmatpush1.msra.mxu0 %v29
    %177 = vmatprep.subr.mxu0 %v129
    %178 = vmatpush1.msra.mxu0 %v128
    %179 = vmatprep.subr.mxu0 %v138
    %180 = vmatpush1.msra.mxu0 %v137
    %181 = vmatprep.subr.mxu0 %v147
    %182 = vmatpush1.msra.mxu0 %v146
    %183 = vmatprep.subr.mxu0 %v156
    %184 = vmatpush1.msra.mxu0 %v155
    %185 = vmatprep.subr.mxu0 0.0
    %186 = vmatpush1.msra.mxu0 0.0
    %187 = vmatprep.subr.mxu0 0.0
    %188 = vmatpush1.msra.mxu0 0.0
    %189 = vmatprep.subr.mxu0 0.0
    %190 = vmatpush1.msra.mxu0 0.0
    %191 = vmatprep.subr.mxu0 0.0
    %192 = vmatpush1.msra.mxu0 0.0
    %193 = vmatprep.subr.mxu0 0.0
    %194 = vmatpush1.msra.mxu0 0.0
    %195 = vmatprep.subr.mxu0 0.0
    %196 = vmatpush1.msra.mxu0 0.0
    %197 = vmatprep.subr.mxu0 0.0
    %198 = vmatpush1.msra.mxu0 0.0
    %199 = vmatprep.subr.mxu0 0.0
    %200 = vmatpush1.msra.mxu0 0.0
    %201 = vmatprep.subr.mxu0 0.0
    %202 = vmatpush1.msra.mxu0 0.0
    %203 = vmatprep.subr.mxu0 0.0
    %204 = vmatpush1.msra.mxu0 0.0
    %205 = vmatprep.subr.mxu0 0.0
    %206 = vmatpush1.msra.mxu0 0.0
    %207 = vmatprep.subr.mxu0 0.0
    %208 = vmatpush1.msra.mxu0 0.0
    %209 = vmatprep.subr.mxu0 0.0
    %210 = vmatpush1.msra.mxu0 0.0
    %211 = vmatprep.subr.mxu0 0.0
    %212 = vmatpush1.msra.mxu0 0.0
    %213 = vmatprep.subr.mxu0 0.0
    %214 = vmatpush1.msra.mxu0 0.0
    %215 = vmatprep.subr.mxu0 0.0
    %216 = vmatpush1.msra.mxu0 0.0
    %217 = vmatprep.subr.mxu0 0.0
    %218 = vmatpush1.msra.mxu0 0.0
    %219 = vmatprep.subr.mxu0 0.0
    %220 = vmatpush1.msra.mxu0 0.0
    %221 = vmatprep.subr.mxu0 0.0
    %222 = vmatpush1.msra.mxu0 0.0
    %223 = vmatprep.subr.mxu0 0.0
    %224 = vmatpush1.msra.mxu0 0.0
    %225 = vmatprep.subr.mxu0 0.0
    %226 = vmatpush1.msra.mxu0 0.0
    %227 = vmatprep.subr.mxu0 0.0
    %228 = vmatpush1.msra.mxu0 0.0
    %229 = vmatprep.subr.mxu0 0.0
    %230 = vmatpush1.msra.mxu0 0.0
    %231 = vmatprep.mubr.f32.mxu0 0.0
    %232 = vmatmul.mubr.f32.gmra.mrb[0].mxu0 %v165
    %v233 = vpop.f32.mrb[0].mxu0
    %v234 = vadd.f32 %v161, %v233
    %v235 = vpop.f32.mrb[0].mxu0
    %v236 = vadd.f32 %v161, %v235
    %237 = vdwg.mxu0
    %v238 = vmax.f32 %v234, 0.0
    %v239 = vmax.f32 %v236, 0.0
    %s240 = scalar_lea.vmem [#allocation2], 8
    %v241 = vld [vmem:[%s240] sm:$0xff]
    %242 = vrot.lane.b32.xlu0 %v238, 17
    %v243 = vpop.permute.xlu0 %242
    %244 = vrot.lane.b32.xlu0 %v239, 17
    %v245 = vpop.permute.xlu0 %244
    %v246 = vsel %vm89, %v243, %v245
    %v247 = vsel %vm89, %v245, %v243
    %v248 = vsel %vm48, %v247, 0.0
    %v249 = vsel %vm49, %v246, 0.0
    %250 = vrot.lane.b32.xlu0 %v238, 16
    %v251 = vpop.permute.xlu0 %250
    %252 = vrot.lane.b32.xlu0 %v239, 16
    %v253 = vpop.permute.xlu0 %252
    %v254 = vsel %vm98, %v251, %v253
    %v255 = vsel %vm98, %v253, %v251
    %v256 = vsel %vm52, %v255, 0.0
    %v257 = vsel %vm53, %v254, 0.0
    %258 = vrot.lane.b32.xlu0 %v238, 15
    %v259 = vpop.permute.xlu0 %258
    %260 = vrot.lane.b32.xlu0 %v239, 15
    %v261 = vpop.permute.xlu0 %260
    %v262 = vsel %vm107, %v259, %v261
    %v263 = vsel %vm107, %v261, %v259
    %v264 = vsel %vm58, %v263, 0.0
    %v265 = vsel %vm59, %v262, 0.0
    %266 = vrot.lane.b32.xlu0 %v238, 1
    %v267 = vpop.permute.xlu0 %266
    %268 = vrot.lane.b32.xlu0 %v239, 1
    %v269 = vpop.permute.xlu0 %268
    %v270 = vsel %vm116, %v267, %v269
    %v271 = vsel %vm116, %v269, %v267
    %v272 = vsel %vm62, %v271, 0.0
    %v273 = vsel %vm63, %v270, 0.0
    %274 = vrot.lane.b32.xlu0 %v238, 127
    %v275 = vpop.permute.xlu0 %274
    %276 = vrot.lane.b32.xlu0 %v239, 127
    %v277 = vpop.permute.xlu0 %276
    %v278 = vsel %vm125, %v275, %v277
    %v279 = vsel %vm125, %v277, %v275
    %v280 = vsel %vm66, %v278, 0.0
    %v281 = vsel %vm67, %v279, 0.0
    %282 = vrot.lane.b32.xlu0 %v238, 113
    %v283 = vpop.permute.xlu0 %282
    %284 = vrot.lane.b32.xlu0 %v239, 113
    %v285 = vpop.permute.xlu0 %284
    %v286 = vsel %vm134, %v283, %v285
    %v287 = vsel %vm134, %v285, %v283
    %v288 = vsel %vm72, %v286, 0.0
    %v289 = vsel %vm73, %v287, 0.0
    %290 = vrot.lane.b32.xlu0 %v238, 112
    %v291 = vpop.permute.xlu0 %290
    %292 = vrot.lane.b32.xlu0 %v239, 112
    %v293 = vpop.permute.xlu0 %292
    %v294 = vsel %vm143, %v291, %v293
    %v295 = vsel %vm143, %v293, %v291
    %v296 = vsel %vm76, %v294, 0.0
    %v297 = vsel %vm77, %v295, 0.0
    %298 = vrot.lane.b32.xlu0 %v238, 111
    %v299 = vpop.permute.xlu0 %298
    %300 = vrot.lane.b32.xlu0 %v239, 111
    %v301 = vpop.permute.xlu0 %300
    %v302 = vsel %vm152, %v299, %v301
    %v303 = vsel %vm152, %v301, %v299
    %v304 = vsel %vm82, %v302, 0.0
    %v305 = vsel %vm83, %v303, 0.0
    %s306 = scalar_lea.vmem %s2, 8
    %v307 = vld [vmem:[%s306] sm:$0xff]
    %309 = vset.pattern.permute.xlu0 0
    %310 = vperm.xlu0 %309, %v307
    %v311 = vpop.permute.xlu0 %310
    %v314 = vsel %vm163, %v241, 0
    %316 = vmatprep.subr.mxu0 %v249
    %317 = vmatpush1.msra.mxu0 %v248
    %318 = vmatprep.subr.mxu0 %v257
    %319 = vmatpush1.msra.mxu0 %v256
    %320 = vmatprep.subr.mxu0 %v265
    %321 = vmatpush1.msra.mxu0 %v264
    %322 = vmatprep.subr.mxu0 %v273
    %323 = vmatpush1.msra.mxu0 %v272
    %324 = vmatprep.subr.mxu0 %v239
    %325 = vmatpush1.msra.mxu0 %v238
    %326 = vmatprep.subr.mxu0 %v281
    %327 = vmatpush1.msra.mxu0 %v280
    %328 = vmatprep.subr.mxu0 %v289
    %329 = vmatpush1.msra.mxu0 %v288
    %330 = vmatprep.subr.mxu0 %v297
    %331 = vmatpush1.msra.mxu0 %v296
    %332 = vmatprep.subr.mxu0 %v305
    %333 = vmatpush1.msra.mxu0 %v304
    %334 = vmatprep.subr.mxu0 0.0
    %335 = vmatpush1.msra.mxu0 0.0
    %336 = vmatprep.subr.mxu0 0.0
    %337 = vmatpush1.msra.mxu0 0.0
    %338 = vmatprep.subr.mxu0 0.0
    %339 = vmatpush1.msra.mxu0 0.0
    %340 = vmatprep.subr.mxu0 0.0
    %341 = vmatpush1.msra.mxu0 0.0
    %342 = vmatprep.subr.mxu0 0.0
    %343 = vmatpush1.msra.mxu0 0.0
    %344 = vmatprep.subr.mxu0 0.0
    %345 = vmatpush1.msra.mxu0 0.0
    %346 = vmatprep.subr.mxu0 0.0
    %347 = vmatpush1.msra.mxu0 0.0
    %348 = vmatprep.subr.mxu0 0.0
    %349 = vmatpush1.msra.mxu0 0.0
    %350 = vmatprep.subr.mxu0 0.0
    %351 = vmatpush1.msra.mxu0 0.0
    %352 = vmatprep.subr.mxu0 0.0
    %353 = vmatpush1.msra.mxu0 0.0
    %354 = vmatprep.subr.mxu0 0.0
    %355 = vmatpush1.msra.mxu0 0.0
    %356 = vmatprep.subr.mxu0 0.0
    %357 = vmatpush1.msra.mxu0 0.0
    %358 = vmatprep.subr.mxu0 0.0
    %359 = vmatpush1.msra.mxu0 0.0
    %360 = vmatprep.subr.mxu0 0.0
    %361 = vmatpush1.msra.mxu0 0.0
    %362 = vmatprep.subr.mxu0 0.0
    %363 = vmatpush1.msra.mxu0 0.0
    %364 = vmatprep.subr.mxu0 0.0
    %365 = vmatpush1.msra.mxu0 0.0
    %366 = vmatprep.subr.mxu0 0.0
    %367 = vmatpush1.msra.mxu0 0.0
    %368 = vmatprep.subr.mxu0 0.0
    %369 = vmatpush1.msra.mxu0 0.0
    %370 = vmatprep.subr.mxu0 0.0
    %371 = vmatpush1.msra.mxu0 0.0
    %372 = vmatprep.subr.mxu0 0.0
    %373 = vmatpush1.msra.mxu0 0.0
    %374 = vmatprep.subr.mxu0 0.0
    %375 = vmatpush1.msra.mxu0 0.0
    %376 = vmatprep.subr.mxu0 0.0
    %377 = vmatpush1.msra.mxu0 0.0
    %378 = vmatprep.subr.mxu0 0.0
    %379 = vmatpush1.msra.mxu0 0.0
    %380 = vmatprep.mubr.f32.mxu0 0.0
    %381 = vmatmul.mubr.f32.gmra.mrb[0].mxu0 %v314
    %v382 = vpop.f32.mrb[0].mxu0
    %v383 = vadd.f32 %v311, %v382
    %v384 = vpop.f32.mrb[0].mxu0
    %v385 = vadd.f32 %v311, %v384
    %386 = vdwg.mxu0
    %v387 = vadd.f32 %v383, %v29
    %v388 = vadd.f32 %v385, %v30
    %v389 = vmax.f32 %v387, 0.0
    %v390 = vmax.f32 %v388, 0.0
    %391 = vst [vmem:[#allocation5] sm:$0xff] %v389
    %392 = vst [vmem:[#allocation5 + $0x8] sm:$0xff] %v390
    // Predicated region
    $region18: #{tpu_custom_call.1} parent=1 // pred_check
      _
    $region19: #{tpu_custom_call.1} parent=1 // pred_check_branch
      %394 = sbr.rel (0) target = $region21
    $region20: #{tpu_custom_call.1} parent=1 // pred_region
      %s396 = ssub.s32 256, 256
      %397 = vsyncadd [#allocation4], %s396
      %s399 = sshll.u32 [#allocation5], 4
      %s400 = int_to_ptr.vmem [resolvable:$true] %s399
      %402 = dma.vmem_to_hbm [thread:$0]  %s400, 256, %s3, [#allocation4]
    $region21: #{tpu_custom_call.1} parent=1 // pred_fallthru
      _
    // Predicated region
    $region22: #{tpu_custom_call.1} parent=1 // pred_check
      _
    $region23: #{tpu_custom_call.1} parent=1 // pred_check_branch
      %404 = sbr.rel (0) target = $region25
    $region24: #{tpu_custom_call.1} parent=1 // pred_region
      %405 = dma.done [#allocation4], 256
    $region25: #{tpu_custom_call.1} parent=1 // pred_fallthru
      _
    %406 = vsyncpa [#allocation3], 1
    %407 = vsyncpa [#allocation4], 1

</llo_original>
